<compile_context>
chip_gen: v6e
topology: v6e:2x2x1
jax: 0.10.0
libtpu: 0.0.40
codegen_flags: <defaults>
</compile_context>

<pallas_src>
import jax
import jax.numpy as jnp
from jax.experimental import pallas as pl
from jax.experimental.pallas import tpu as pltpu


def _attn_scores_kernel(hidden_ref, enc_t_ref, w_ref, out_ref):
    h = hidden_ref[...]          # (TB, H)  step-batch on sublanes, hidden on lanes
    enc_t = enc_t_ref[...]       # (H, S)   hidden on sublanes, seq on lanes
    w = w_ref[...]               # (H, H)   PyTorch nn.Linear weight (out, in)

    # V = hidden @ W  (== W^T @ hidden per row).  The hidden.b bias term is a
    # constant over the sequence axis and cancels under softmax -> dropped.
    v = jnp.dot(h, w, preferred_element_type=jnp.float32)        # (TB, H)

    # Standard MXU (TB,H)x(H,S): contraction sits on rhs sublanes, so the
    # energies come out lane-dense over the sequence axis (no vxpose).
    e = jnp.dot(v, enc_t, preferred_element_type=jnp.float32)    # (TB, S)

    # softmax over the sequence (lane) axis
    m = jnp.max(e, axis=-1, keepdims=True)
    ex = jnp.exp(e - m)
    denom = jnp.sum(ex, axis=-1, keepdims=True)
    # denom is one scalar per row; exact reciprocal keeps the 1e-5 check safe
    # and no VLIW slot is near saturation at these shapes.
    out_ref[...] = (ex * pl.reciprocal(denom, approx=False)).astype(out_ref.dtype)


def attn_general_batched(hidden_batch, encoder_outputs, W, b, *, block_b=8):
    """Score a batch of decoder steps in one pallas_call.

    hidden_batch:    (B, H)  one hidden state per decoder step / batch element
    encoder_outputs: (S, H)  shared across all steps
    W: (H, H) nn.Linear weight (out, in);  b: (H,) bias (cancels under softmax)
    returns softmax attention weights, shape (B, S).
    """
    del b  # hidden.b is constant over the sequence axis -> cancels in softmax
    B, H = hidden_batch.shape
    S, H2 = encoder_outputs.shape
    assert H == H2 == W.shape[0] == W.shape[1]

    tb = B if B < block_b else block_b
    assert B % tb == 0, "demo wrapper assumes the step-batch tiles evenly"

    # One-time, shared-across-all-steps relayout: H on sublanes, S on lanes so
    # the in-kernel energy dot is a plain MXU pass (lane-dense output).
    enc_t = encoder_outputs.T                                    # (H, S)

    out = pl.pallas_call(
        _attn_scores_kernel,
        out_shape=jax.ShapeDtypeStruct((B, S), jnp.float32),
        grid=(B // tb,),
        in_specs=[
            pl.BlockSpec((tb, H), lambda i: (i, 0)),   # streamed per step-tile
            pl.BlockSpec((H, S), lambda i: (0, 0)),    # enc^T resident in VMEM
            pl.BlockSpec((H, H), lambda i: (0, 0)),    # W resident in VMEM
        ],
        out_specs=pl.BlockSpec((tb, S), lambda i: (i, 0)),
        compiler_params=pltpu.CompilerParams(
            dimension_semantics=("parallel",)),
    )(hidden_batch, enc_t, W)
    return out
    # TODO(synk): the bigger win is fusing this scoring into the surrounding
    # decoder-step kernel (or letting XLA fuse it) instead of a standalone
    # custom call; at S>=128, also pad/tile S to multiples of 128 lanes.


def attn_general(hidden, encoder_outputs, W, b):
    """Single-step module-equivalent forward: hidden (H,) -> (1, 1, S)."""
    S, H = encoder_outputs.shape
    out = attn_general_batched(hidden.reshape(1, H), encoder_outputs, W, b)
    return out.reshape(1, 1, S)


def attn_general_ref(hidden, encoder_outputs, W, b):
    # Pure-JAX reference of the PyTorch forward (bias kept, as in the module).
    proj = encoder_outputs @ W.T + b              # (S, H)
    e = proj @ hidden                             # (S,)
    return jax.nn.softmax(e).reshape(1, 1, -1)


if __name__ == "__main__":
    hidden_size = 32
    seq_len = 8
    n_steps = 16    # decoder steps batched into one pallas_call (grid axis)

    key = jax.random.PRNGKey(0)
    k_h, k_e, k_w, k_b = jax.random.split(key, 4)

    hidden_batch = jax.random.normal(k_h, (n_steps, hidden_size),
                                     dtype=jnp.float32)
    encoder_outputs = jax.random.normal(k_e, (seq_len, hidden_size),
                                        dtype=jnp.float32)
    # deterministic "nn.Linear(hidden_size, hidden_size)" params
    bound = 1.0 / jnp.sqrt(hidden_size)
    W = jax.random.uniform(k_w, (hidden_size, hidden_size),
                           minval=-bound, maxval=bound, dtype=jnp.float32)
    b = jax.random.uniform(k_b, (hidden_size,),
                           minval=-bound, maxval=bound, dtype=jnp.float32)

    # Batched path: many decoder steps amortized over one pallas_call.
    out_b = attn_general_batched(hidden_batch, encoder_outputs, W, b)
    out_b = jax.block_until_ready(out_b)
    ref_b = jax.vmap(
        lambda h: attn_general_ref(h, encoder_outputs, W, b).reshape(-1)
    )(hidden_batch)
    assert out_b.shape == (n_steps, seq_len)
    assert jnp.allclose(out_b, ref_b, atol=1e-5, rtol=1e-5)

    # Single-step path: exact nn.Module forward signature/output shape.
    out_1 = attn_general(hidden_batch[0], encoder_outputs, W, b)
    out_1 = jax.block_until_ready(out_1)
    ref_1 = attn_general_ref(hidden_batch[0], encoder_outputs, W, b)
    assert out_1.shape == (1, 1, seq_len)
    assert jnp.allclose(out_1, ref_1, atol=1e-5, rtol=1e-5)

    print("KERNEL_OK")
</pallas_src>

<mosaic_0001>
module attributes {stable_mosaic.version = 11 : i64} {
  func.func @_attn_scores_kernel(%arg0: i32, %arg1: memref<8x32xf32, #tpu.memory_space<vmem>>, %arg2: memref<32x8xf32, #tpu.memory_space<vmem>>, %arg3: memref<32x32xf32, #tpu.memory_space<vmem>>, %arg4: memref<8x8xf32, #tpu.memory_space<vmem>>) attributes {dimension_semantics = [#tpu.dimension_semantics<parallel>], iteration_bounds = array<i64: 2>, scalar_prefetch = 0 : i64, scratch_operands = 0 : i64, tpu.core_type = #tpu.core_type<tc>, window_params = [{transform_indices = @transform_0, window_bounds = array<i64: 8, 32>}, {pipeline_mode = #tpu.pipeline_mode<synchronous>, transform_indices = @transform_1, window_bounds = array<i64: 32, 8>}, {pipeline_mode = #tpu.pipeline_mode<synchronous>, transform_indices = @transform_2, window_bounds = array<i64: 32, 32>}, {transform_indices = @transform_3, window_bounds = array<i64: 8, 8>}]} {
    %c0 = arith.constant 0 : index
    %c0_0 = arith.constant 0 : index
    %0 = vector.load %arg1[%c0, %c0_0] : memref<8x32xf32, #tpu.memory_space<vmem>>, vector<8x32xf32>
    %c0_1 = arith.constant 0 : index
    %c0_2 = arith.constant 0 : index
    %1 = vector.load %arg2[%c0_1, %c0_2] : memref<32x8xf32, #tpu.memory_space<vmem>>, vector<32x8xf32>
    %c0_3 = arith.constant 0 : index
    %c0_4 = arith.constant 0 : index
    %2 = vector.load %arg3[%c0_3, %c0_4] : memref<32x32xf32, #tpu.memory_space<vmem>>, vector<32x32xf32>
    %cst = arith.constant dense<0.000000e+00> : vector<8x32xf32>
    %3 = tpu.matmul %0, %2, %cst {dimension_numbers = #tpu.dot_dimension_numbers<[1], [0], [0], [1], [0, 0, 1, 1], [], []>} : vector<8x32xf32>, vector<32x32xf32>, vector<8x32xf32> -> vector<8x32xf32>
    %cst_5 = arith.constant dense<0.000000e+00> : vector<8x8xf32>
    %4 = tpu.matmul %3, %1, %cst_5 {dimension_numbers = #tpu.dot_dimension_numbers<[1], [0], [0], [1], [0, 0, 1, 1], [], []>} : vector<8x32xf32>, vector<32x8xf32>, vector<8x8xf32> -> vector<8x8xf32>
    %cst_6 = arith.constant dense<0xFF800000> : vector<8xf32>
    %5 = vector.multi_reduction <maximumf>, %4, %cst_6 [1] : vector<8x8xf32> to vector<8xf32>
    %6 = vector.shape_cast %5 : vector<8xf32> to vector<8x1xf32>
    %7 = vector.broadcast %6 : vector<8x1xf32> to vector<8x8xf32>
    %8 = arith.subf %4, %7 : vector<8x8xf32>
    %9 = math.exp %8 : vector<8x8xf32>
    %cst_7 = arith.constant dense<0.000000e+00> : vector<8xf32>
    %10 = vector.multi_reduction <add>, %9, %cst_7 [1] : vector<8x8xf32> to vector<8xf32>
    %11 = vector.shape_cast %10 : vector<8xf32> to vector<8x1xf32>
    %12 = tpu.reciprocal %11 : vector<8x1xf32> -> vector<8x1xf32>
    %13 = vector.broadcast %12 : vector<8x1xf32> to vector<8x8xf32>
    %14 = arith.mulf %9, %13 : vector<8x8xf32>
    %c0_8 = arith.constant 0 : index
    %c0_9 = arith.constant 0 : index
    %15 = vector.load %arg4[%c0_8, %c0_9] : memref<8x8xf32, #tpu.memory_space<vmem>>, vector<8x8xf32>
    tpu.vector_store %arg4[%c0_8, %c0_9], %14 {strides = array<i32>} : memref<8x8xf32, #tpu.memory_space<vmem>>, vector<8x8xf32>,
    return
  }
  func.func @transform_0(%arg0: i32) -> (i32, i32) {
    %c0_i32 = arith.constant 0 : i32
    %c0_i32_0 = arith.constant 0 : i32
    return %arg0, %c0_i32 : i32, i32
  }
  func.func @transform_1(%arg0: i32) -> (i32, i32) {
    %c0_i32 = arith.constant 0 : i32
    %c0_i32_0 = arith.constant 0 : i32
    %c0_i32_1 = arith.constant 0 : i32
    return %c0_i32, %c0_i32_0 : i32, i32
  }
  func.func @transform_2(%arg0: i32) -> (i32, i32) {
    %c0_i32 = arith.constant 0 : i32
    %c0_i32_0 = arith.constant 0 : i32
    %c0_i32_1 = arith.constant 0 : i32
    return %c0_i32, %c0_i32_0 : i32, i32
  }
  func.func @transform_3(%arg0: i32) -> (i32, i32) {
    %c0_i32 = arith.constant 0 : i32
    %c0_i32_0 = arith.constant 0 : i32
    return %arg0, %c0_i32 : i32, i32
  }
}

</mosaic_0001>

<llo_original>
// kernel: tpu_custom_call.1
$region0: #{tpu_custom_call.1}
  #allocation0 [shape = 'u32[]', space=smem, size = 0x4, offset = 0x4, fixed_abs, tag = 'smem constant byte address 0x4 - core index']
  #allocation1 [shape = 'u32[144,128]{1,0:T(1,128)}', space=vmem, size = 0x12000, scoped, tag = 'internal scratch']
  %s0 = inlined_call_operand.hbm [shape: f32[16,32], index: 0, kind: input, shape index: {}]
  %s1 = inlined_call_operand.vmem [shape: f32[32,8], index: 1, kind: input, shape index: {}]
  %s2 = inlined_call_operand.vmem [shape: f32[32,32], index: 2, kind: input, shape index: {}]
  %s3 = inlined_call_operand.vmem [shape: f32[16,8], index: 3, kind: output, shape index: {}]
  %s4 = sld [smem:[#allocation0]]
  $region49: #{tpu_custom_call.1} parent=0
    _
  %s6 = ssub.s32 1, %s4
  %s7 = scalar_select 0, %s6, %s4
  $region1: #{tpu_custom_call.1} parent=0
    #allocation2 [shape = 'u8[8192]{0}', space=vmem, size = 0x2000, scoped, tag = 'input window, operand 0']
    #allocation3 [shape = 's32[2]{0}', space=sflag, size = 0x8, scoped, tag = 'scoped memory for tpu_custom_call.1']
    %8 = vsyncpa [#allocation3], 0
    %s9 = scalar_lea.sflag [#allocation3], 1
    %10 = vsyncpa %s9, 0
    loop: start=0, step=1, limit=4
    $region2: #{tpu_custom_call.1} parent=1 // loop_pre_header
      _
    $region3: #{tpu_custom_call.1} parent=1 // loop_header
      %s12 = sphi 0, %s16
      %p13 = scmp.ge.s32.totalorder %s12, 4
      %s22 = sphi 0, %s24
      %s25 = sphi 0, %s22
      %s26 = sphi 0, %s25
      %s42 = sphi 0, %s26
      %s46 = sphi 0, %s46
      %s48 = sphi 0, %s46
      %s49 = sphi 0, %s48
      %s63 = sphi 0, %s49
      %s67 = sphi 0, %s67
      %s69 = sphi 0, %s67
      %s70 = sphi 0, %s69
      %s84 = sphi 0, %s70
      %s90 = sphi 0, %s92
      %s93 = sphi 0, %s90
      %s94 = sphi 0, %s93
      %s110 = sphi 0, %s94
    $region4: #{tpu_custom_call.1} parent=1 // loop_header_branch
      %15 = sbr.rel (%p13) target = $region8
    $region5: #{tpu_custom_call.1} parent=1 // loop_body
      %s17 = ssub.s32 %s12, 1
      %s18 = ssub.s32 %s12, 2
      %s19 = sadd.s32 %s12, 1
      %s20 = ssub.s32 %s12, %s19
      %p21 = scmp.eq.s32.totalorder %s20, 0
      %s23 = sadd.s32 %s22, 1
      %s24 = scalar_select %p21, %s22, %s23
      %p27 = pneg %p21
      %p28 = scmp.eq.s32.totalorder %s12, 1
      %p29 = por %p27, %p28
      %p30 = scmp.ne.s32.totalorder %s22, %s25
      %p31 = scmp.eq.s32.totalorder %s12, 0
      %p32 = por %p30, %p31
      %p33 = scmp.ne.s32.totalorder %s22, %s25
      %p34 = scmp.eq.s32.totalorder %s17, 1
      %p35 = por %p33, %p34
      %p36 = scmp.ne.s32.totalorder %s25, %s26
      %p37 = scmp.eq.s32.totalorder %s17, 0
      %p38 = por %p36, %p37
      %p39 = scmp.ne.s32.totalorder %s25, %s26
      %p40 = scmp.eq.s32.totalorder %s18, 1
      %p41 = por %p39, %p40
      %p43 = scmp.ne.s32.totalorder %s26, %s42
      %p44 = scmp.eq.s32.totalorder %s18, 0
      %p45 = por %p43, %p44
      %s47 = sadd.s32 %s46, 1
      %p50 = scmp.eq.s32.totalorder %s12, 1
      %p51 = scmp.ne.s32.totalorder %s46, %s48
      %p52 = scmp.eq.s32.totalorder %s12, 0
      %p53 = por %p51, %p52
      %p54 = scmp.ne.s32.totalorder %s46, %s48
      %p55 = scmp.eq.s32.totalorder %s17, 1
      %p56 = por %p54, %p55
      %p57 = scmp.ne.s32.totalorder %s48, %s49
      %p58 = scmp.eq.s32.totalorder %s17, 0
      %p59 = por %p57, %p58
      %p60 = scmp.ne.s32.totalorder %s48, %s49
      %p61 = scmp.eq.s32.totalorder %s18, 1
      %p62 = por %p60, %p61
      %p64 = scmp.ne.s32.totalorder %s49, %s63
      %p65 = scmp.eq.s32.totalorder %s18, 0
      %p66 = por %p64, %p65
      %s68 = sadd.s32 %s67, 1
      %p71 = scmp.eq.s32.totalorder %s12, 1
      %p72 = scmp.ne.s32.totalorder %s67, %s69
      %p73 = scmp.eq.s32.totalorder %s12, 0
      %p74 = por %p72, %p73
      %p75 = scmp.ne.s32.totalorder %s67, %s69
      %p76 = scmp.eq.s32.totalorder %s17, 1
      %p77 = por %p75, %p76
      %p78 = scmp.ne.s32.totalorder %s69, %s70
      %p79 = scmp.eq.s32.totalorder %s17, 0
      %p80 = por %p78, %p79
      %p81 = scmp.ne.s32.totalorder %s69, %s70
      %p82 = scmp.eq.s32.totalorder %s18, 1
      %p83 = por %p81, %p82
      %p85 = scmp.ne.s32.totalorder %s70, %s84
      %p86 = scmp.eq.s32.totalorder %s18, 0
      %p87 = por %p85, %p86
      %s88 = ssub.s32 %s12, %s19
      %p89 = scmp.eq.s32.totalorder %s88, 0
      %s91 = sadd.s32 %s90, 1
      %s92 = scalar_select %p89, %s90, %s91
      %p95 = pneg %p89
      %p96 = scmp.eq.s32.totalorder %s12, 1
      %p97 = por %p95, %p96
      %p98 = scmp.ne.s32.totalorder %s90, %s93
      %p99 = scmp.eq.s32.totalorder %s12, 0
      %p100 = por %p98, %p99
      %p101 = scmp.ne.s32.totalorder %s90, %s93
      %p102 = scmp.eq.s32.totalorder %s17, 1
      %p103 = por %p101, %p102
      %p104 = scmp.ne.s32.totalorder %s93, %s94
      %p105 = scmp.eq.s32.totalorder %s17, 0
      %p106 = por %p104, %p105
      %p107 = scmp.ne.s32.totalorder %s93, %s94
      %p108 = scmp.eq.s32.totalorder %s18, 1
      %p109 = por %p107, %p108
      %p111 = scmp.ne.s32.totalorder %s94, %s110
      %p112 = scmp.eq.s32.totalorder %s18, 0
      %p113 = por %p111, %p112
      %p114 = scmp.le.s32.totalorder 1, %s12
      %p115 = scmp.lt.s32.totalorder %s12, 3
      %p116 = pnand %p114, %p115
      %p117 = pneg %p116
      // Predicated region
      $region9: #{tpu_custom_call.1} parent=5 // pred_check
        _
      $region10: #{tpu_custom_call.1} parent=5 // pred_check_branch
        %119 = sbr.rel (%p116) target = $region12
      $region11: #{tpu_custom_call.1} parent=5 // pred_region
        %s120 = ssub.s32 %s12, 1
        // Predicated region
        $region13: #{tpu_custom_call.1} parent=11 // pred_check
          %p121 = pneg %p59
        $region14: #{tpu_custom_call.1} parent=11 // pred_check_branch
          %123 = sbr.rel (%p121) target = $region16
        $region15: #{tpu_custom_call.1} parent=11 // pred_region
          _
        $region16: #{tpu_custom_call.1} parent=11 // pred_fallthru
          _
        // Predicated region
        $region17: #{tpu_custom_call.1} parent=11 // pred_check
          %p124 = pneg %p80
        $region18: #{tpu_custom_call.1} parent=11 // pred_check_branch
          %126 = sbr.rel (%p124) target = $region20
        $region19: #{tpu_custom_call.1} parent=11 // pred_region
          _
        $region20: #{tpu_custom_call.1} parent=11 // pred_fallthru
          _
      $region12: #{tpu_custom_call.1} parent=5 // pred_fallthru
        _
      %p127 = scmp.lt.s32.totalorder %s12, 2
      // Predicated region
      $region21: #{tpu_custom_call.1} parent=5 // pred_check
        %p128 = pneg %p127
      $region22: #{tpu_custom_call.1} parent=5 // pred_check_branch
        %130 = sbr.rel (%p128) target = $region24
      $region23: #{tpu_custom_call.1} parent=5 // pred_region
        // Predicated region
        $region25: #{tpu_custom_call.1} parent=23 // pred_check
          %p131 = pneg %p32
        $region26: #{tpu_custom_call.1} parent=23 // pred_check_branch
          %133 = sbr.rel (%p131) target = $region28
        $region27: #{tpu_custom_call.1} parent=23 // pred_region
          %s134 = sand.u32 %s22, 1
          %s135 = scalar_lea.sflag [#allocation3], %s134
          %s136 = sand.u32 %s22, 1
          %s137 = smul.addr %s136, 8
          %s138 = scalar_lea.vmem [#allocation2], %s137
          %s140 = ssub.s32 128, 128
          %141 = vsyncadd %s135, %s140
          %s142 = smul.addr %s12, 128
          %s143 = scalar_lea.hbm %s0, %s142
          %s145 = sshll.u32 %s138, 4
          %s146 = int_to_ptr.vmem [resolvable:$true] %s145
          %148 = dma.hbm_to_vmem [thread:$0]  %s143, 128, %s146, %s135
        $region28: #{tpu_custom_call.1} parent=23 // pred_fallthru
          _
      $region24: #{tpu_custom_call.1} parent=5 // pred_fallthru
        _
      %p149 = scmp.le.s32.totalorder 1, %s12
      %p150 = scmp.lt.s32.totalorder %s12, 3
      %p151 = pnand %p149, %p150
      %p152 = pneg %p151
      // Predicated region
      $region29: #{tpu_custom_call.1} parent=5 // pred_check
        _
      $region30: #{tpu_custom_call.1} parent=5 // pred_check_branch
        %154 = sbr.rel (%p151) target = $region32
      $region31: #{tpu_custom_call.1} parent=5 // pred_region
        %s155 = ssub.s32 %s12, 1
        %s156 = sand.u32 %s25, 1
        %s157 = scalar_lea.sflag [#allocation3], %s156
        %s158 = sand.u32 %s25, 1
        %s159 = smul.addr %s158, 8
        %s160 = scalar_lea.vmem [#allocation2], %s159
        // Predicated region
        $region33: #{tpu_custom_call.1} parent=31 // pred_check
          %p161 = pneg %p38
        $region34: #{tpu_custom_call.1} parent=31 // pred_check_branch
          %163 = sbr.rel (%p161) target = $region36
        $region35: #{tpu_custom_call.1} parent=31 // pred_region
          %164 = dma.done %s157, 128
        $region36: #{tpu_custom_call.1} parent=31 // pred_fallthru
          _
        %s165 = sand.u32 %s25, 1
        %s166 = scalar_lea.sflag [#allocation3], %s165
        %s167 = sand.u32 %s25, 1
        %s168 = smul.addr %s167, 8
        %s169 = scalar_lea.vmem [#allocation2], %s168
        %p170 = pneg %p38
        %p171 = pneg %p35
        %p172 = pneg %p59
        %p173 = pneg %p56
        %p174 = pneg %p80
        %p175 = pneg %p77
        %p176 = pneg %p106
        %p177 = pneg %p103
        %p178 = scmp.lt.s32.totalorder %s17, 1
        %s179 = scalar_select %p178, %s17, 1
        %s180 = smul.addr %s179, 8
        %s181 = scalar_lea.vmem %s3, %s180
        %p182 = scmp.lt.s32.totalorder %s17, 1
        %s183 = scalar_select %p182, %s17, 1
        %s184 = smul.addr %s183, 8
        %s185 = scalar_lea.vmem %s3, %s184
        %v186 = vld [vmem:[%s160] sm:$0xff]
        %v187 = vld [vmem:[%s1] sm:$0xff]
        %v188 = vld [vmem:[%s1 + $0x8] sm:$0xff]
        %v189 = vld [vmem:[%s1 + $0x10] sm:$0xff]
        %v190 = vld [vmem:[%s1 + $0x18] sm:$0xff]
        %v191 = vld [vmem:[%s2] sm:$0xff]
        %v192 = vld [vmem:[%s2 + $0x8] sm:$0xff]
        %v193 = vld [vmem:[%s2 + $0x10] sm:$0xff]
        %v194 = vld [vmem:[%s2 + $0x18] sm:$0xff]
        %vm195 = vcmask 261120
        %v197 = vsel %vm195, %v186, 0
        %199 = vmatprep.subr.mxu0 0.0
        %200 = vmatpush1.msra.mxu0 0.0
        %201 = vmatprep.subr.mxu0 0.0
        %202 = vmatpush1.msra.mxu0 0.0
        %203 = vmatprep.subr.mxu0 0.0
        %204 = vmatpush1.msra.mxu0 0.0
        %205 = vmatprep.subr.mxu0 0.0
        %206 = vmatpush1.msra.mxu0 0.0
        %207 = vmatprep.subr.mxu0 0.0
        %208 = vmatpush1.msra.mxu0 0.0
        %209 = vmatprep.subr.mxu0 0.0
        %210 = vmatpush1.msra.mxu0 0.0
        %211 = vmatprep.subr.mxu0 0.0
        %212 = vmatpush1.msra.mxu0 0.0
        %213 = vmatprep.subr.mxu0 0.0
        %214 = vmatpush1.msra.mxu0 0.0
        %215 = vmatprep.subr.mxu0 0.0
        %216 = vmatpush1.msra.mxu0 0.0
        %217 = vmatprep.subr.mxu0 0.0
        %218 = vmatpush1.msra.mxu0 0.0
        %219 = vmatprep.subr.mxu0 0.0
        %220 = vmatpush1.msra.mxu0 0.0
        %221 = vmatprep.subr.mxu0 0.0
        %222 = vmatpush1.msra.mxu0 0.0
        %223 = vmatprep.subr.mxu0 0.0
        %224 = vmatpush1.msra.mxu0 %v194
        %225 = vmatprep.subr.mxu0 0.0
        %226 = vmatpush1.msra.mxu0 %v193
        %227 = vmatprep.subr.mxu0 0.0
        %228 = vmatpush1.msra.mxu0 %v192
        %229 = vmatprep.subr.mxu0 0.0
        %230 = vmatpush1.msra.mxu0 %v191
        %231 = vmatprep.subr.mxu0 0.0
        %232 = vmatpush2.msra.mxu0 0.0
        %233 = vmatprep.subr.mxu0 0.0
        %234 = vmatpush2.msra.mxu0 0.0
        %235 = vmatprep.subr.mxu0 0.0
        %236 = vmatpush2.msra.mxu0 0.0
        %237 = vmatprep.subr.mxu0 0.0
        %238 = vmatpush2.msra.mxu0 0.0
        %239 = vmatprep.subr.mxu0 0.0
        %240 = vmatpush2.msra.mxu0 0.0
        %241 = vmatprep.subr.mxu0 0.0
        %242 = vmatpush2.msra.mxu0 0.0
        %243 = vmatprep.subr.mxu0 0.0
        %244 = vmatpush2.msra.mxu0 0.0
        %245 = vmatprep.subr.mxu0 0.0
        %246 = vmatpush2.msra.mxu0 0.0
        %247 = vmatprep.subr.mxu0 0.0
        %248 = vmatpush2.msra.mxu0 0.0
        %249 = vmatprep.subr.mxu0 0.0
        %250 = vmatpush2.msra.mxu0 0.0
        %251 = vmatprep.subr.mxu0 0.0
        %252 = vmatpush2.msra.mxu0 0.0
        %253 = vmatprep.subr.mxu0 0.0
        %254 = vmatpush2.msra.mxu0 0.0
        %255 = vmatprep.subr.mxu0 0.0
        %256 = vmatpush2.msra.mxu0 0.0
        %257 = vmatprep.subr.mxu0 0.0
        %258 = vmatpush2.msra.mxu0 0.0
        %259 = vmatprep.subr.mxu0 0.0
        %260 = vmatpush2.msra.mxu0 0.0
        %261 = vmatprep.subr.mxu0 0.0
        %262 = vmatpush2.msra.mxu0 0.0
        %263 = vmatprep.mubr.f32.mxu0 0.0
        %264 = vmatmul.mubr.f32.gmra.mxu0 %v197
        %v265 = vpop.f32.mrf.mxu0
        %v266 = vadd.f32 0.0, %v265
        %v267 = vpop.f32.mrf.mxu0
        %268 = vdwg.mxu0
        %v270 = vsel %vm195, %v266, 0
        %272 = vmatprep.subr.mxu0 0.0
        %273 = vmatpush1.msra.mxu0 0.0
        %274 = vmatprep.subr.mxu0 0.0
        %275 = vmatpush1.msra.mxu0 0.0
        %276 = vmatprep.subr.mxu0 0.0
        %277 = vmatpush1.msra.mxu0 0.0
        %278 = vmatprep.subr.mxu0 0.0
        %279 = vmatpush1.msra.mxu0 0.0
        %280 = vmatprep.subr.mxu0 0.0
        %281 = vmatpush1.msra.mxu0 0.0
        %282 = vmatprep.subr.mxu0 0.0
        %283 = vmatpush1.msra.mxu0 0.0
        %284 = vmatprep.subr.mxu0 0.0
        %285 = vmatpush1.msra.mxu0 0.0
        %286 = vmatprep.subr.mxu0 0.0
        %287 = vmatpush1.msra.mxu0 0.0
        %288 = vmatprep.subr.mxu0 0.0
        %289 = vmatpush1.msra.mxu0 0.0
        %290 = vmatprep.subr.mxu0 0.0
        %291 = vmatpush1.msra.mxu0 0.0
        %292 = vmatprep.subr.mxu0 0.0
        %293 = vmatpush1.msra.mxu0 0.0
        %294 = vmatprep.subr.mxu0 0.0
        %295 = vmatpush1.msra.mxu0 0.0
        %296 = vmatprep.subr.mxu0 0.0
        %297 = vmatpush1.msra.mxu0 %v190
        %298 = vmatprep.subr.mxu0 0.0
        %299 = vmatpush1.msra.mxu0 %v189
        %300 = vmatprep.subr.mxu0 0.0
        %301 = vmatpush1.msra.mxu0 %v188
        %302 = vmatprep.subr.mxu0 0.0
        %303 = vmatpush1.msra.mxu0 %v187
        %304 = vmatprep.subr.mxu0 0.0
        %305 = vmatpush2.msra.mxu0 0.0
        %306 = vmatprep.subr.mxu0 0.0
        %307 = vmatpush2.msra.mxu0 0.0
        %308 = vmatprep.subr.mxu0 0.0
        %309 = vmatpush2.msra.mxu0 0.0
        %310 = vmatprep.subr.mxu0 0.0
        %311 = vmatpush2.msra.mxu0 0.0
        %312 = vmatprep.subr.mxu0 0.0
        %313 = vmatpush2.msra.mxu0 0.0
        %314 = vmatprep.subr.mxu0 0.0
        %315 = vmatpush2.msra.mxu0 0.0
        %316 = vmatprep.subr.mxu0 0.0
        %317 = vmatpush2.msra.mxu0 0.0
        %318 = vmatprep.subr.mxu0 0.0
        %319 = vmatpush2.msra.mxu0 0.0
        %320 = vmatprep.subr.mxu0 0.0
        %321 = vmatpush2.msra.mxu0 0.0
        %322 = vmatprep.subr.mxu0 0.0
        %323 = vmatpush2.msra.mxu0 0.0
        %324 = vmatprep.subr.mxu0 0.0
        %325 = vmatpush2.msra.mxu0 0.0
        %326 = vmatprep.subr.mxu0 0.0
        %327 = vmatpush2.msra.mxu0 0.0
        %328 = vmatprep.subr.mxu0 0.0
        %329 = vmatpush2.msra.mxu0 0.0
        %330 = vmatprep.subr.mxu0 0.0
        %331 = vmatpush2.msra.mxu0 0.0
        %332 = vmatprep.subr.mxu0 0.0
        %333 = vmatpush2.msra.mxu0 0.0
        %334 = vmatprep.subr.mxu0 0.0
        %335 = vmatpush2.msra.mxu0 0.0
        %336 = vmatprep.mubr.f32.mxu0 0.0
        %337 = vmatmul.mubr.f32.gmra.mxu0 %v270
        %v338 = vpop.f32.mrf.mxu0
        %v339 = vadd.f32 0.0, %v338
        %v340 = vpop.f32.mrf.mxu0
        %341 = vdwg.mxu0
        %vm342 = vcmask 64512
        %v343 = vsel %vm342, %v339, -inf
        %344 = vmax.xlane.f32.xlu0 %v343
        %v345 = vpop.xlane.xlu0 %344
        %v346 = vsub.f32 %v339, %v345
        %v347 = vmul.f32 %v346, 1.442695
        %v348 = vpow.pop %v347
        %v349 = vsel %vm342, %v348, 0.0
        %350 = vadd.xlane.f32.xlu0 %v349
        %v351 = vpop.xlane.xlu0 %350
        %v352 = vrcp.pop %v351
        %v353 = vmul.f32 %v348, %v352
        %354 = vst.msk [vmem:[%s185] sm:$0xff] %vm342, %v353
        %p355 = scmp.lt.s32.totalorder %s17, 1
        %s356 = scalar_select %p355, %s17, 1
        %s357 = smul.addr %s356, 8
        %s358 = scalar_lea.vmem %s3, %s357
        // Predicated region
        $region37: #{tpu_custom_call.1} parent=31 // pred_check
          %p359 = pneg %p103
        $region38: #{tpu_custom_call.1} parent=31 // pred_check_branch
          %361 = sbr.rel (%p359) target = $region40
        $region39: #{tpu_custom_call.1} parent=31 // pred_region
          _
        $region40: #{tpu_custom_call.1} parent=31 // pred_fallthru
          _
      $region32: #{tpu_custom_call.1} parent=5 // pred_fallthru
        _
      %p362 = scmp.le.s32.totalorder 2, %s12
      // Predicated region
      $region41: #{tpu_custom_call.1} parent=5 // pred_check
        %p363 = pneg %p362
      $region42: #{tpu_custom_call.1} parent=5 // pred_check_branch
        %365 = sbr.rel (%p363) target = $region44
      $region43: #{tpu_custom_call.1} parent=5 // pred_region
        %s366 = ssub.s32 %s12, 2
        // Predicated region
        $region45: #{tpu_custom_call.1} parent=43 // pred_check
          %p367 = pneg %p109
        $region46: #{tpu_custom_call.1} parent=43 // pred_check_branch
          %369 = sbr.rel (%p367) target = $region48
        $region47: #{tpu_custom_call.1} parent=43 // pred_region
          %p370 = scmp.lt.s32.totalorder %s18, 1
          %s371 = scalar_select %p370, %s18, 1
          %s372 = smul.addr %s371, 8
          %s373 = scalar_lea.vmem %s3, %s372
        $region48: #{tpu_custom_call.1} parent=43 // pred_fallthru
          _
      $region44: #{tpu_custom_call.1} parent=5 // pred_fallthru
        _
    $region6: #{tpu_custom_call.1} parent=1 // loop_footer
      %s16 = sadd.s32 1, %s12
    $region7: #{tpu_custom_call.1} parent=1 // loop_footer_branch
      %11 = sbr.rel target = $region3
    $region8: #{tpu_custom_call.1} parent=1 // loop_exit
      _
    %374 = vsyncpa [#allocation3], 1
    %s375 = scalar_lea.sflag [#allocation3], 1
    %376 = vsyncpa %s375, 1

</llo_original>
